<compile_context>
chip_gen: v7x
topology: tpu7x:2x2x1
jax: 0.10.0
libtpu: 0.0.40
codegen_flags: <defaults>
</compile_context>

<pallas_src>
import math
import functools
import numpy as np
import jax
import jax.numpy as jnp
from jax.experimental import pallas as pl
from jax.experimental.pallas import tpu as pltpu


# ----------------------------------------------------------------------------
# Pallas kernel: full stacked-layer RGCN forward, single invocation (no grid).
# ----------------------------------------------------------------------------
def _make_rgcn_stack_kernel(num_layers: int, num_rel_slots: int, n_nodes: int, h_dim: int):
    L, R, N, D = num_layers, num_rel_slots, n_nodes, h_dim   # R = 2*num_rels + 1 (self-loop slot)

    def kernel(a_ref, w_ref, h_ref, out_ref):
        # a_ref : [N, R*N]    f32   fused adjacency (norm folded in f32; identity block = self-loop)
        # w_ref : [L, D, R*D] bf16  relation-lane-packed weights, self-loop weight in the last slot
        # h_ref : [N, D]      f32   initial node features
        h = h_ref[...]
        for l in range(L):                                   # static unroll over layers
            # Stage 1: ONE MXU call computes every relation transform + the self-loop transform.
            hw = jnp.dot(h.astype(jnp.bfloat16), w_ref[l],
                         preferred_element_type=jnp.float32)             # [N, R*D]

            # Lanes -> sublanes relayout (cheap XLU work): [N, R*D] -> [R*N, D].
            hw_stacked = jnp.concatenate(
                [hw[:, r * D:(r + 1) * D] for r in range(R)], axis=0)     # [R*N, D]

            # Stage 2: ONE MXU call aggregates over (relation, src) with exact f32 norms,
            # and adds the self-loop via the identity block of a_ref.
            acc = jnp.dot(a_ref[...], hw_stacked,
                          preferred_element_type=jnp.float32)             # [N, D]

            # ReLU on hidden layers, identity on the last (matches build_hidden_layer).
            if l != L - 1:
                acc = jnp.maximum(acc, 0.0)
            h = acc

        out_ref[...] = h.astype(out_ref.dtype)               # single small store

    return kernel


def rgcn_stack_forward(h0, a_wide, w_packed):
    """Full multi-layer RGCN forward in one pallas_call.

    h0       : [N, D]             f32   initial node features
    a_wide   : [N, (R2+1)*N]      f32   fused adjacency (+ identity self-loop block)
    w_packed : [L, D, (R2+1)*D]   bf16  lane-packed relation + self-loop weights
    """
    N, D = h0.shape
    L = w_packed.shape[0]
    R = a_wide.shape[1] // N
    kernel = _make_rgcn_stack_kernel(L, R, N, D)
    vmem = pl.BlockSpec(memory_space=pltpu.MemorySpace.VMEM)   # whole arrays resident in VMEM
    # TODO(synk): when N grows, a_wide is ~(R)*N^2*4 bytes and hits v7x's default 32 MiB scoped
    #             VMEM around N~1.1K (64 MiB physical): switch to a grid over dst-row tiles
    #             (BlockSpec((TILE_N, R*N)) on a_wide / h / out, dimension_semantics=("parallel",))
    #             which also engages v7x's second TensorCore. At N=16, gridless is optimal.
    return pl.pallas_call(
        kernel,
        out_shape=jax.ShapeDtypeStruct((N, D), jnp.float32),
        in_specs=[vmem, vmem, vmem],
        out_specs=vmem,
    )(a_wide, w_packed, h0)


# ----------------------------------------------------------------------------
# One-time constant preparation (outside the per-call hot path).
# ----------------------------------------------------------------------------
def xavier_uniform(key, shape, gain):
    fan_in, fan_out = shape[-2], shape[-1]
    bound = gain * math.sqrt(6.0 / (fan_in + fan_out))
    return jax.random.uniform(key, shape, jnp.float32, -bound, bound)


def expand_block_diag(w_blocks):
    """[R2, B, d_in, d_out] block weights -> dense [R2, B*d_in, B*d_out] block-diagonal."""
    R2, B, d_in, d_out = w_blocks.shape
    dense = jnp.zeros((R2, B * d_in, B * d_out), w_blocks.dtype)
    for b in range(B):
        dense = dense.at[:, b * d_in:(b + 1) * d_in, b * d_out:(b + 1) * d_out].set(w_blocks[:, b])
    return dense


def pack_relation_weights(w_rel_list, w_loop_list):
    """Lane-pack per-layer weights: W_packed[l][d_in, r*D + d_out] = W_r[d_in, d_out];
    the self-loop weight occupies the last slot r = R2.  Returns bf16 packed weights plus
    the f32 dense weights for reference checking."""
    packed, dense_all = [], []
    for w_rel, w_loop in zip(w_rel_list, w_loop_list):
        w_dense = expand_block_diag(w_rel)                          # [R2, D, D] f32
        dense_all.append(w_dense)
        w_all = jnp.concatenate([w_dense, w_loop[None]], axis=0)    # [R2+1, D, D]
        D = w_all.shape[-1]
        packed.append(jnp.transpose(w_all, (1, 0, 2)).reshape(D, -1))   # [D, (R2+1)*D]
    return (jnp.stack(packed, 0).astype(jnp.bfloat16),              # [L, D, (R2+1)*D] bf16
            jnp.stack(dense_all, 0),                                # [L, R2, D, D]    f32
            jnp.stack(w_loop_list, 0))                              # [L, D, D]        f32


def build_adjacency(src, dst, rel, num_rels, N):
    """Fused dense relational adjacency: a_wide[dst, r*N + src] = counts[r,dst,src] / in_deg[dst]
    (forward + inverse relations), with an identity block appended for the self-loop.
    Norm stays in f32 (never rounded to bf16).  Also returns (counts, norm) for the reference."""
    # TODO(synk): at realistic graph sizes, replace the dense adjacency with per-relation edge
    #             lists / CSR + scalar-prefetch tiling inside the kernel.
    R2 = 2 * num_rels
    src_all = jnp.concatenate([src, dst])
    dst_all = jnp.concatenate([dst, src])
    rel_all = jnp.concatenate([rel, rel + num_rels])
    counts = jnp.zeros((R2, N, N), jnp.float32).at[rel_all, dst_all, src_all].add(1.0)
    # TODO(synk): total-in-degree norm (DGL comp_deg_norm convention); switch to per-relation
    #             c_{i,r} here if the reference PyTorch model uses that convention instead.
    in_deg = counts.sum(axis=(0, 2))
    norm = 1.0 / jnp.maximum(in_deg, 1.0)
    a_norm = counts * norm[None, :, None]                           # f32
    a_wide = jnp.transpose(a_norm, (1, 0, 2)).reshape(N, R2 * N)    # [N, R2*N], [dst, r*N+src]
    a_wide = jnp.concatenate([a_wide, jnp.eye(N, dtype=jnp.float32)], axis=1)
    return a_wide, counts, norm


# ----------------------------------------------------------------------------
# Forward (hot path): embedding gather -> single Pallas kernel -> per-graph split.
# ----------------------------------------------------------------------------
@functools.partial(jax.jit, static_argnames=("graphs_length",))
def rgcn_forward(node_embeds, node_ids, a_wide, w_packed, graphs_length):
    """RGCN.forward: init_embed (embedding-table path) -> stacked RGCNBlockLayers -> split."""
    # TODO(synk): BERT-init averaging of sent_h rows + vertex-dict file remapping needs external
    #             data; only the node-embedding-table (random_init_list) path is implemented.
    # TODO(synk): nn.Dropout is identity in eval mode; omitted.
    h = node_embeds[node_ids]
    h = rgcn_stack_forward(h, a_wide, w_packed)
    splits = tuple(int(s) for s in np.cumsum(np.array(graphs_length))[:-1])
    embeds = jnp.split(h, splits, axis=0)
    r_weight = None                       # model='rgcn' => rel_embeds is None
    return embeds, r_weight


# ----------------------------------------------------------------------------
# Pure-numpy float64 reference (per-relation message passing, un-fused).
# ----------------------------------------------------------------------------
def rgcn_reference_np(h0, counts, norm, w_dense_all, w_loop_all):
    h = np.asarray(h0, np.float64)
    counts = np.asarray(counts, np.float64)
    norm = np.asarray(norm, np.float64)
    wd = np.asarray(w_dense_all, np.float64)
    wl = np.asarray(w_loop_all, np.float64)
    L, R2 = wd.shape[0], wd.shape[1]
    for l in range(L):
        acc = h @ wl[l]
        for r in range(R2):
            acc = acc + (counts[r] * norm[:, None]) @ (h @ wd[l, r])
        if l != L - 1:
            acc = np.maximum(acc, 0.0)
        h = acc
    return h


# ----------------------------------------------------------------------------
# Main
# ----------------------------------------------------------------------------
if __name__ == "__main__":
    h_dim = 32
    num_rels = 3            # -> 6 relation types (forward + inverse)
    num_bases = 4           # block decomposition: 4 blocks of 8x8
    num_layers = 2
    num_nodes_vocab = 32    # size of self.node_embeds table
    graphs_length = (8, 8)
    N = sum(graphs_length)
    d_sub = h_dim // num_bases
    R2 = 2 * num_rels
    gain = math.sqrt(2.0)   # nn.init.calculate_gain('relu')

    key = jax.random.PRNGKey(0)
    k_emb, k_w, k_loop, k_ids, k_edge = jax.random.split(key, 5)

    node_embeds = xavier_uniform(k_emb, (num_nodes_vocab, h_dim), gain)
    w_rel_list = [xavier_uniform(k, (R2, num_bases, d_sub, d_sub), gain)
                  for k in jax.random.split(k_w, num_layers)]
    w_loop_list = [xavier_uniform(k, (h_dim, h_dim), gain)
                   for k in jax.random.split(k_loop, num_layers)]

    # Node ids for the batched graph (gathered from the node embedding table).
    node_ids = jax.random.randint(k_ids, (N,), 0, num_nodes_vocab)

    # Synthetic batched graph: 12 intra-graph edges per graph, node ids offset per graph.
    edges_per_graph = 12
    offsets = np.concatenate([[0], np.cumsum(np.array(graphs_length))[:-1]])
    src_list, dst_list, rel_list = [], [], []
    for g_idx, (off, n_g) in enumerate(zip(offsets, graphs_length)):
        ks, kd, kr = jax.random.split(jax.random.fold_in(k_edge, g_idx), 3)
        src_list.append(jax.random.randint(ks, (edges_per_graph,), 0, n_g) + int(off))
        dst_list.append(jax.random.randint(kd, (edges_per_graph,), 0, n_g) + int(off))
        rel_list.append(jax.random.randint(kr, (edges_per_graph,), 0, num_rels))
    src = jnp.concatenate(src_list)
    dst = jnp.concatenate(dst_list)
    rel = jnp.concatenate(rel_list)

    # --- one-time constant prep (kept out of the per-call forward path) ---
    a_wide, counts, norm = build_adjacency(src, dst, rel, num_rels, N)
    w_packed, w_dense_all, w_loop_all = pack_relation_weights(w_rel_list, w_loop_list)
    a_wide, w_packed = jax.block_until_ready((a_wide, w_packed))

    # --- forward pass ---
    embeds, r_weight = rgcn_forward(node_embeds, node_ids, a_wide, w_packed, graphs_length)
    embeds = [jax.block_until_ready(e) for e in embeds]

    # Shape / finiteness checks.
    assert r_weight is None
    assert len(embeds) == len(graphs_length)
    assert embeds[0].shape == (graphs_length[0], h_dim)
    assert embeds[1].shape == (graphs_length[1], h_dim)
    out = np.concatenate([np.asarray(e) for e in embeds], axis=0)
    assert np.all(np.isfinite(out))

    # Numerical check against an un-fused float64 reference (kernel uses bf16 only for the
    # stage-1 MXU inputs, so the agreement is well inside these tolerances).
    h0 = np.asarray(node_embeds)[np.asarray(node_ids)]
    ref = rgcn_reference_np(h0, counts, norm, w_dense_all, w_loop_all)
    np.testing.assert_allclose(out, ref, rtol=5e-2, atol=5e-2)

    print("KERNEL_OK")
</pallas_src>

<mosaic_0001>
module attributes {stable_mosaic.version = 11 : i64} {
  func.func @kernel(%arg0: memref<16x112xf32, #tpu.memory_space<vmem>>, %arg1: memref<2x32x224xbf16, #tpu.memory_space<vmem>>, %arg2: memref<16x32xf32, #tpu.memory_space<vmem>>, %arg3: memref<16x32xf32, #tpu.memory_space<vmem>>) attributes {dimension_semantics = [], scalar_prefetch = 0 : i64, scratch_operands = 0 : i64, tpu.core_type = #tpu.core_type<tc>} {
    %c0 = arith.constant 0 : index
    %c0_0 = arith.constant 0 : index
    %0 = vector.load %arg2[%c0, %c0_0] : memref<16x32xf32, #tpu.memory_space<vmem>>, vector<16x32xf32>
    %1 = arith.truncf %0 : vector<16x32xf32> to vector<16x32xbf16>
    %c0_1 = arith.constant 0 : index
    %c0_2 = arith.constant 0 : index
    %c0_3 = arith.constant 0 : index
    %2 = vector.load %arg1[%c0_1, %c0_2, %c0_3] : memref<2x32x224xbf16, #tpu.memory_space<vmem>>, vector<1x32x224xbf16>
    %3 = vector.shape_cast %2 : vector<1x32x224xbf16> to vector<32x224xbf16>
    %cst = arith.constant dense<0.000000e+00> : vector<16x224xf32>
    %4 = tpu.matmul %1, %3, %cst {dimension_numbers = #tpu.dot_dimension_numbers<[1], [0], [0], [1], [0, 0, 1, 1], [], []>} : vector<16x32xbf16>, vector<32x224xbf16>, vector<16x224xf32> -> vector<16x224xf32>
    %5 = vector.extract_strided_slice %4 {offsets = [0, 0], sizes = [16, 32], strides = [1, 1]} : vector<16x224xf32> to vector<16x32xf32>
    %6 = vector.extract_strided_slice %4 {offsets = [0, 32], sizes = [16, 32], strides = [1, 1]} : vector<16x224xf32> to vector<16x32xf32>
    %7 = vector.extract_strided_slice %4 {offsets = [0, 64], sizes = [16, 32], strides = [1, 1]} : vector<16x224xf32> to vector<16x32xf32>
    %8 = vector.extract_strided_slice %4 {offsets = [0, 96], sizes = [16, 32], strides = [1, 1]} : vector<16x224xf32> to vector<16x32xf32>
    %9 = vector.extract_strided_slice %4 {offsets = [0, 128], sizes = [16, 32], strides = [1, 1]} : vector<16x224xf32> to vector<16x32xf32>
    %10 = vector.extract_strided_slice %4 {offsets = [0, 160], sizes = [16, 32], strides = [1, 1]} : vector<16x224xf32> to vector<16x32xf32>
    %11 = vector.extract_strided_slice %4 {offsets = [0, 192], sizes = [16, 32], strides = [1, 1]} : vector<16x224xf32> to vector<16x32xf32>
    %12 = tpu.concatenate %5, %6, %7, %8, %9, %10, %11 in 0 : vector<16x32xf32>, vector<16x32xf32>, vector<16x32xf32>, vector<16x32xf32>, vector<16x32xf32>, vector<16x32xf32>, vector<16x32xf32> -> vector<112x32xf32>
    %c0_4 = arith.constant 0 : index
    %c0_5 = arith.constant 0 : index
    %13 = vector.load %arg0[%c0_4, %c0_5] : memref<16x112xf32, #tpu.memory_space<vmem>>, vector<16x112xf32>
    %cst_6 = arith.constant dense<0.000000e+00> : vector<16x32xf32>
    %14 = tpu.matmul %13, %12, %cst_6 {dimension_numbers = #tpu.dot_dimension_numbers<[1], [0], [0], [1], [0, 0, 1, 1], [], []>} : vector<16x112xf32>, vector<112x32xf32>, vector<16x32xf32> -> vector<16x32xf32>
    %cst_7 = arith.constant 0.000000e+00 : f32
    %15 = vector.broadcast %cst_7 : f32 to vector<16x32xf32>
    %16 = arith.maximumf %14, %15 : vector<16x32xf32>
    %17 = arith.truncf %16 : vector<16x32xf32> to vector<16x32xbf16>
    %c1 = arith.constant 1 : index
    %c0_8 = arith.constant 0 : index
    %c0_9 = arith.constant 0 : index
    %18 = vector.load %arg1[%c1, %c0_8, %c0_9] : memref<2x32x224xbf16, #tpu.memory_space<vmem>>, vector<1x32x224xbf16>
    %19 = vector.shape_cast %18 : vector<1x32x224xbf16> to vector<32x224xbf16>
    %cst_10 = arith.constant dense<0.000000e+00> : vector<16x224xf32>
    %20 = tpu.matmul %17, %19, %cst_10 {dimension_numbers = #tpu.dot_dimension_numbers<[1], [0], [0], [1], [0, 0, 1, 1], [], []>} : vector<16x32xbf16>, vector<32x224xbf16>, vector<16x224xf32> -> vector<16x224xf32>
    %21 = vector.extract_strided_slice %20 {offsets = [0, 0], sizes = [16, 32], strides = [1, 1]} : vector<16x224xf32> to vector<16x32xf32>
    %22 = vector.extract_strided_slice %20 {offsets = [0, 32], sizes = [16, 32], strides = [1, 1]} : vector<16x224xf32> to vector<16x32xf32>
    %23 = vector.extract_strided_slice %20 {offsets = [0, 64], sizes = [16, 32], strides = [1, 1]} : vector<16x224xf32> to vector<16x32xf32>
    %24 = vector.extract_strided_slice %20 {offsets = [0, 96], sizes = [16, 32], strides = [1, 1]} : vector<16x224xf32> to vector<16x32xf32>
    %25 = vector.extract_strided_slice %20 {offsets = [0, 128], sizes = [16, 32], strides = [1, 1]} : vector<16x224xf32> to vector<16x32xf32>
    %26 = vector.extract_strided_slice %20 {offsets = [0, 160], sizes = [16, 32], strides = [1, 1]} : vector<16x224xf32> to vector<16x32xf32>
    %27 = vector.extract_strided_slice %20 {offsets = [0, 192], sizes = [16, 32], strides = [1, 1]} : vector<16x224xf32> to vector<16x32xf32>
    %28 = tpu.concatenate %21, %22, %23, %24, %25, %26, %27 in 0 : vector<16x32xf32>, vector<16x32xf32>, vector<16x32xf32>, vector<16x32xf32>, vector<16x32xf32>, vector<16x32xf32>, vector<16x32xf32> -> vector<112x32xf32>
    %c0_11 = arith.constant 0 : index
    %c0_12 = arith.constant 0 : index
    %29 = vector.load %arg0[%c0_11, %c0_12] : memref<16x112xf32, #tpu.memory_space<vmem>>, vector<16x112xf32>
    %cst_13 = arith.constant dense<0.000000e+00> : vector<16x32xf32>
    %30 = tpu.matmul %29, %28, %cst_13 {dimension_numbers = #tpu.dot_dimension_numbers<[1], [0], [0], [1], [0, 0, 1, 1], [], []>} : vector<16x112xf32>, vector<112x32xf32>, vector<16x32xf32> -> vector<16x32xf32>
    %c0_14 = arith.constant 0 : index
    %c0_15 = arith.constant 0 : index
    %31 = vector.load %arg3[%c0_14, %c0_15] : memref<16x32xf32, #tpu.memory_space<vmem>>, vector<16x32xf32>
    tpu.vector_store %arg3[%c0_14, %c0_15], %30 {strides = array<i32>} : memref<16x32xf32, #tpu.memory_space<vmem>>, vector<16x32xf32>,
    return
  }
}

</mosaic_0001>

<llo_original>
// kernel: rgcn_forward.1
$region0: #{rgcn_forward.1}
  #allocation0 [shape = 'u32[]', space=smem, size = 0x4, offset = 0x4, fixed_abs, tag = 'smem constant byte address 0x4 - core index']
  #allocation1 [shape = 'u32[144,128]{1,0:T(1,128)}', space=vmem, size = 0x12000, scoped, tag = 'internal scratch']
  %s0 = inlined_call_operand.vmem [shape: f32[16,112], index: 0, kind: input, shape index: {}]
  %s1 = inlined_call_operand.vmem [shape: bf16[2,32,224], index: 1, kind: input, shape index: {}]
  %s2 = inlined_call_operand.vmem [shape: f32[16,32], index: 2, kind: input, shape index: {}]
  %s3 = inlined_call_operand.vmem [shape: f32[16,32], index: 3, kind: output, shape index: {}]
  %s4 = sld [smem:[#allocation0]]
  $region22: #{rgcn_forward.1} parent=0
    _
  %s6 = ssub.s32 1, %s4
  %s7 = scalar_select 0, %s6, %s4
  // Predicated region
  $region2: #{rgcn_forward.1} parent=0 // pred_check
    _
  $region3: #{rgcn_forward.1} parent=0 // pred_check_branch
    %9 = sbr.rel (0) target = $region5
  $region4: #{rgcn_forward.1} parent=0 // pred_region
    _
  $region5: #{rgcn_forward.1} parent=0 // pred_fallthru
    _
  // Predicated region
  $region6: #{rgcn_forward.1} parent=0 // pred_check
    _
  $region7: #{rgcn_forward.1} parent=0 // pred_check_branch
    %11 = sbr.rel (0) target = $region9
  $region8: #{rgcn_forward.1} parent=0 // pred_region
    _
  $region9: #{rgcn_forward.1} parent=0 // pred_fallthru
    _
  // Predicated region
  $region10: #{rgcn_forward.1} parent=0 // pred_check
    _
  $region11: #{rgcn_forward.1} parent=0 // pred_check_branch
    %13 = sbr.rel (0) target = $region13
  $region12: #{rgcn_forward.1} parent=0 // pred_region
    _
  $region13: #{rgcn_forward.1} parent=0 // pred_fallthru
    _
  %v15 = vld [vmem:[%s2] sm:$0xff]
  %v16 = vld [vmem:[%s2 + $0x8] sm:$0xff]
  %v17 = vpack.c.bf16 %v16, %v15
  %v18 = vld [vmem:[%s1] sm:$0xff]
  %v19 = vld [vmem:[%s1 + $0x8] sm:$0xff]
  %v20 = vld [vmem:[%s1 + $0x10] sm:$0xff]
  %v21 = vld [vmem:[%s1 + $0x18] sm:$0xff]
  %v26 = vunpack.c.l.b16 %v18
  %v27 = vunpack.c.h.b16 %v18
  %v28 = vunpack.c.l.b16 %v19
  %v29 = vunpack.c.h.b16 %v19
  %v30 = vunpack.c.l.b16 %v20
  %v31 = vunpack.c.h.b16 %v20
  %v32 = vunpack.c.l.b16 %v21
  %v33 = vunpack.c.h.b16 %v21
  %v34 = vpack.c.b16 %v28, %v26
  %v35 = vpack.c.b16 %v29, %v27
  %v36 = vpack.c.b16 %v32, %v30
  %v37 = vpack.c.b16 %v33, %v31
  %vm42 = vcmask 261120
  %v44 = vsel %vm42, %v17, 0
  %46 = vmatprep.subr.bf16.mxu0 %v35
  %47 = vmatpush1.bf16.msra.mxu0 %v34
  %48 = vmatprep.subr.bf16.mxu0 %v37
  %49 = vmatpush1.bf16.msra.mxu0 %v36
  %50 = vmatprep.subr.bf16.mxu0 0
  %51 = vmatpush1.bf16.msra.mxu0 0
  %52 = vmatprep.subr.bf16.mxu0 0
  %53 = vmatpush1.bf16.msra.mxu0 0
  %54 = vmatprep.subr.bf16.mxu0 0
  %55 = vmatpush1.bf16.msra.mxu0 0
  %56 = vmatprep.subr.bf16.mxu0 0
  %57 = vmatpush1.bf16.msra.mxu0 0
  %58 = vmatprep.subr.bf16.mxu0 0
  %59 = vmatpush1.bf16.msra.mxu0 0
  %60 = vmatprep.subr.bf16.mxu0 0
  %61 = vmatpush1.bf16.msra.mxu0 0
  %62 = vmatprep.subr.bf16.mxu0 0
  %63 = vmatpush1.bf16.msra.mxu0 0
  %64 = vmatprep.subr.bf16.mxu0 0
  %65 = vmatpush1.bf16.msra.mxu0 0
  %66 = vmatprep.subr.bf16.mxu0 0
  %67 = vmatpush1.bf16.msra.mxu0 0
  %68 = vmatprep.subr.bf16.mxu0 0
  %69 = vmatpush1.bf16.msra.mxu0 0
  %70 = vmatprep.subr.bf16.mxu0 0
  %71 = vmatpush1.bf16.msra.mxu0 0
  %72 = vmatprep.subr.bf16.mxu0 0
  %73 = vmatpush1.bf16.msra.mxu0 0
  %74 = vmatprep.subr.bf16.mxu0 0
  %75 = vmatpush1.bf16.msra.mxu0 0
  %76 = vmatprep.subr.bf16.mxu0 0
  %77 = vmatpush1.bf16.msra.mxu0 0
  %78 = vmatprep.mubr.bf16.mxu0 0
  %79 = vmatmul.mubr.bf16.gmra.mrb[0].mxu0 %v44
  %v80 = vpop.f32.mrb[0].mxu0
  %v81 = vadd.f32 0.0, %v80
  %v82 = vpop.f32.mrb[0].mxu0
  %v83 = vadd.f32 0.0, %v82
  %v84 = vpop.f32.mrb[0].mxu0
  %v85 = vadd.f32 0.0, %v84
  %v86 = vpop.f32.mrb[0].mxu0
  %v87 = vadd.f32 0.0, %v86
  %88 = vdwg.mxu0
  %91 = vrot.lane.b32.xlu0 %v81, 96
  %v92 = vpop.permute.xlu0 %91
  %93 = vrot.lane.b32.xlu0 %v85, 96
  %v94 = vpop.permute.xlu0 %93
  %97 = vrot.lane.b32.xlu0 %v81, 64
  %v98 = vpop.permute.xlu0 %97
  %99 = vrot.lane.b32.xlu0 %v85, 64
  %v100 = vpop.permute.xlu0 %99
  %103 = vrot.lane.b32.xlu0 %v81, 32
  %v104 = vpop.permute.xlu0 %103
  %105 = vrot.lane.b32.xlu0 %v85, 32
  %v106 = vpop.permute.xlu0 %105
  %111 = vrot.lane.b32.xlu0 %v83, 96
  %v112 = vpop.permute.xlu0 %111
  %113 = vrot.lane.b32.xlu0 %v87, 96
  %v114 = vpop.permute.xlu0 %113
  %117 = vrot.lane.b32.xlu0 %v83, 64
  %v118 = vpop.permute.xlu0 %117
  %119 = vrot.lane.b32.xlu0 %v87, 64
  %v120 = vpop.permute.xlu0 %119
  %v123 = vld [vmem:[%s0] sm:$0xff]
  %v124 = vld [vmem:[%s0 + $0x8] sm:$0xff]
  %vm125 = vcmask 916480
  %v127 = vsel %vm125, %v123, 0
  %v130 = vsel %vm125, %v124, 0
  %132 = vmatprep.subr.mxu0 0.0
  %133 = vmatpush1.msra.mxu0 %v81
  %134 = vmatprep.subr.mxu0 0.0
  %135 = vmatpush1.msra.mxu0 %v85
  %136 = vmatprep.subr.mxu0 0.0
  %137 = vmatpush1.msra.mxu0 %v92
  %138 = vmatprep.subr.mxu0 0.0
  %139 = vmatpush1.msra.mxu0 %v94
  %140 = vmatprep.subr.mxu0 0.0
  %141 = vmatpush1.msra.mxu0 %v98
  %142 = vmatprep.subr.mxu0 0.0
  %143 = vmatpush1.msra.mxu0 %v100
  %144 = vmatprep.subr.mxu0 0.0
  %145 = vmatpush1.msra.mxu0 %v104
  %146 = vmatprep.subr.mxu0 0.0
  %147 = vmatpush1.msra.mxu0 %v106
  %148 = vmatprep.subr.mxu0 0.0
  %149 = vmatpush1.msra.mxu0 %v83
  %150 = vmatprep.subr.mxu0 0.0
  %151 = vmatpush1.msra.mxu0 %v87
  %152 = vmatprep.subr.mxu0 0.0
  %153 = vmatpush1.msra.mxu0 %v112
  %154 = vmatprep.subr.mxu0 0.0
  %155 = vmatpush1.msra.mxu0 %v114
  %156 = vmatprep.subr.mxu0 0.0
  %157 = vmatpush1.msra.mxu0 %v118
  %158 = vmatprep.subr.mxu0 0.0
  %159 = vmatpush1.msra.mxu0 %v120
  %160 = vmatprep.subr.mxu0 0.0
  %161 = vmatpush1.msra.mxu0 0.0
  %162 = vmatprep.subr.mxu0 0.0
  %163 = vmatpush1.msra.mxu0 0.0
  %164 = vmatprep.subr.mxu0 0.0
  %165 = vmatpush1.msra.mxu0 0.0
  %166 = vmatprep.subr.mxu0 0.0
  %167 = vmatpush1.msra.mxu0 0.0
  %168 = vmatprep.subr.mxu0 0.0
  %169 = vmatpush1.msra.mxu0 0.0
  %170 = vmatprep.subr.mxu0 0.0
  %171 = vmatpush1.msra.mxu0 0.0
  %172 = vmatprep.subr.mxu0 0.0
  %173 = vmatpush1.msra.mxu0 0.0
  %174 = vmatprep.subr.mxu0 0.0
  %175 = vmatpush1.msra.mxu0 0.0
  %176 = vmatprep.subr.mxu0 0.0
  %177 = vmatpush1.msra.mxu0 0.0
  %178 = vmatprep.subr.mxu0 0.0
  %179 = vmatpush1.msra.mxu0 0.0
  %180 = vmatprep.subr.mxu0 0.0
  %181 = vmatpush1.msra.mxu0 0.0
  %182 = vmatprep.subr.mxu0 0.0
  %183 = vmatpush1.msra.mxu0 0.0
  %184 = vmatprep.subr.mxu0 0.0
  %185 = vmatpush1.msra.mxu0 0.0
  %186 = vmatprep.subr.mxu0 0.0
  %187 = vmatpush1.msra.mxu0 0.0
  %188 = vmatprep.subr.mxu0 0.0
  %189 = vmatpush1.msra.mxu0 0.0
  %190 = vmatprep.subr.mxu0 0.0
  %191 = vmatpush1.msra.mxu0 0.0
  %192 = vmatprep.subr.mxu0 0.0
  %193 = vmatpush1.msra.mxu0 0.0
  %194 = vmatprep.subr.mxu0 0.0
  %195 = vmatpush1.msra.mxu0 0.0
  %196 = vmatprep.mubr.f32.mxu0 0.0
  %197 = vmatmul.mubr.f32.gmra.mrb[0].mxu0 %v127
  %v198 = vpop.f32.mrb[0].mxu0
  %v199 = vadd.f32 0.0, %v198
  %v200 = vpop.f32.mrb[0].mxu0
  %201 = vmatprep.mubr.f32.mxu0 0.0
  %202 = vmatmul.mubr.f32.gmra.mrb[0].mxu0 %v130
  %v203 = vpop.f32.mrb[0].mxu0
  %v204 = vadd.f32 0.0, %v203
  %v205 = vpop.f32.mrb[0].mxu0
  %206 = vdwg.mxu0
  %v207 = vmax.f32 %v199, 0.0
  %v208 = vmax.f32 %v204, 0.0
  %v209 = vpack.c.bf16 %v208, %v207
  %s210 = scalar_lea.vmem %s1, 32
  %v211 = vld [vmem:[%s210] sm:$0xff]
  %v212 = vld [vmem:[%s210 + $0x8] sm:$0xff]
  %v213 = vld [vmem:[%s210 + $0x10] sm:$0xff]
  %v214 = vld [vmem:[%s210 + $0x18] sm:$0xff]
  %v219 = vunpack.c.l.b16 %v211
  %v220 = vunpack.c.h.b16 %v211
  %v221 = vunpack.c.l.b16 %v212
  %v222 = vunpack.c.h.b16 %v212
  %v223 = vunpack.c.l.b16 %v213
  %v224 = vunpack.c.h.b16 %v213
  %v225 = vunpack.c.l.b16 %v214
  %v226 = vunpack.c.h.b16 %v214
  %v227 = vpack.c.b16 %v221, %v219
  %v228 = vpack.c.b16 %v222, %v220
  %v229 = vpack.c.b16 %v225, %v223
  %v230 = vpack.c.b16 %v226, %v224
  %v236 = vsel %vm42, %v209, 0
  %238 = vmatprep.subr.bf16.mxu0 %v228
  %239 = vmatpush1.bf16.msra.mxu0 %v227
  %240 = vmatprep.subr.bf16.mxu0 %v230
  %241 = vmatpush1.bf16.msra.mxu0 %v229
  %242 = vmatprep.subr.bf16.mxu0 0
  %243 = vmatpush1.bf16.msra.mxu0 0
  %244 = vmatprep.subr.bf16.mxu0 0
  %245 = vmatpush1.bf16.msra.mxu0 0
  %246 = vmatprep.subr.bf16.mxu0 0
  %247 = vmatpush1.bf16.msra.mxu0 0
  %248 = vmatprep.subr.bf16.mxu0 0
  %249 = vmatpush1.bf16.msra.mxu0 0
  %250 = vmatprep.subr.bf16.mxu0 0
  %251 = vmatpush1.bf16.msra.mxu0 0
  %252 = vmatprep.subr.bf16.mxu0 0
  %253 = vmatpush1.bf16.msra.mxu0 0
  %254 = vmatprep.subr.bf16.mxu0 0
  %255 = vmatpush1.bf16.msra.mxu0 0
  %256 = vmatprep.subr.bf16.mxu0 0
  %257 = vmatpush1.bf16.msra.mxu0 0
  %258 = vmatprep.subr.bf16.mxu0 0
  %259 = vmatpush1.bf16.msra.mxu0 0
  %260 = vmatprep.subr.bf16.mxu0 0
  %261 = vmatpush1.bf16.msra.mxu0 0
  %262 = vmatprep.subr.bf16.mxu0 0
  %263 = vmatpush1.bf16.msra.mxu0 0
  %264 = vmatprep.subr.bf16.mxu0 0
  %265 = vmatpush1.bf16.msra.mxu0 0
  %266 = vmatprep.subr.bf16.mxu0 0
  %267 = vmatpush1.bf16.msra.mxu0 0
  %268 = vmatprep.subr.bf16.mxu0 0
  %269 = vmatpush1.bf16.msra.mxu0 0
  %270 = vmatprep.mubr.bf16.mxu0 0
  %271 = vmatmul.mubr.bf16.gmra.mrb[0].mxu0 %v236
  %v272 = vpop.f32.mrb[0].mxu0
  %v273 = vadd.f32 0.0, %v272
  %v274 = vpop.f32.mrb[0].mxu0
  %v275 = vadd.f32 0.0, %v274
  %v276 = vpop.f32.mrb[0].mxu0
  %v277 = vadd.f32 0.0, %v276
  %v278 = vpop.f32.mrb[0].mxu0
  %v279 = vadd.f32 0.0, %v278
  %280 = vdwg.mxu0
  %283 = vrot.lane.b32.xlu0 %v273, 96
  %v284 = vpop.permute.xlu0 %283
  %285 = vrot.lane.b32.xlu0 %v277, 96
  %v286 = vpop.permute.xlu0 %285
  %289 = vrot.lane.b32.xlu0 %v273, 64
  %v290 = vpop.permute.xlu0 %289
  %291 = vrot.lane.b32.xlu0 %v277, 64
  %v292 = vpop.permute.xlu0 %291
  %295 = vrot.lane.b32.xlu0 %v273, 32
  %v296 = vpop.permute.xlu0 %295
  %297 = vrot.lane.b32.xlu0 %v277, 32
  %v298 = vpop.permute.xlu0 %297
  %303 = vrot.lane.b32.xlu0 %v275, 96
  %v304 = vpop.permute.xlu0 %303
  %305 = vrot.lane.b32.xlu0 %v279, 96
  %v306 = vpop.permute.xlu0 %305
  %309 = vrot.lane.b32.xlu0 %v275, 64
  %v310 = vpop.permute.xlu0 %309
  %311 = vrot.lane.b32.xlu0 %v279, 64
  %v312 = vpop.permute.xlu0 %311
  %315 = vmatprep.subr.mxu0 0.0
  %316 = vmatpush1.msra.mxu0 %v273
  %317 = vmatprep.subr.mxu0 0.0
  %318 = vmatpush1.msra.mxu0 %v277
  %319 = vmatprep.subr.mxu0 0.0
  %320 = vmatpush1.msra.mxu0 %v284
  %321 = vmatprep.subr.mxu0 0.0
  %322 = vmatpush1.msra.mxu0 %v286
  %323 = vmatprep.subr.mxu0 0.0
  %324 = vmatpush1.msra.mxu0 %v290
  %325 = vmatprep.subr.mxu0 0.0
  %326 = vmatpush1.msra.mxu0 %v292
  %327 = vmatprep.subr.mxu0 0.0
  %328 = vmatpush1.msra.mxu0 %v296
  %329 = vmatprep.subr.mxu0 0.0
  %330 = vmatpush1.msra.mxu0 %v298
  %331 = vmatprep.subr.mxu0 0.0
  %332 = vmatpush1.msra.mxu0 %v275
  %333 = vmatprep.subr.mxu0 0.0
  %334 = vmatpush1.msra.mxu0 %v279
  %335 = vmatprep.subr.mxu0 0.0
  %336 = vmatpush1.msra.mxu0 %v304
  %337 = vmatprep.subr.mxu0 0.0
  %338 = vmatpush1.msra.mxu0 %v306
  %339 = vmatprep.subr.mxu0 0.0
  %340 = vmatpush1.msra.mxu0 %v310
  %341 = vmatprep.subr.mxu0 0.0
  %342 = vmatpush1.msra.mxu0 %v312
  %343 = vmatprep.subr.mxu0 0.0
  %344 = vmatpush1.msra.mxu0 0.0
  %345 = vmatprep.subr.mxu0 0.0
  %346 = vmatpush1.msra.mxu0 0.0
  %347 = vmatprep.subr.mxu0 0.0
  %348 = vmatpush1.msra.mxu0 0.0
  %349 = vmatprep.subr.mxu0 0.0
  %350 = vmatpush1.msra.mxu0 0.0
  %351 = vmatprep.subr.mxu0 0.0
  %352 = vmatpush1.msra.mxu0 0.0
  %353 = vmatprep.subr.mxu0 0.0
  %354 = vmatpush1.msra.mxu0 0.0
  %355 = vmatprep.subr.mxu0 0.0
  %356 = vmatpush1.msra.mxu0 0.0
  %357 = vmatprep.subr.mxu0 0.0
  %358 = vmatpush1.msra.mxu0 0.0
  %359 = vmatprep.subr.mxu0 0.0
  %360 = vmatpush1.msra.mxu0 0.0
  %361 = vmatprep.subr.mxu0 0.0
  %362 = vmatpush1.msra.mxu0 0.0
  %363 = vmatprep.subr.mxu0 0.0
  %364 = vmatpush1.msra.mxu0 0.0
  %365 = vmatprep.subr.mxu0 0.0
  %366 = vmatpush1.msra.mxu0 0.0
  %367 = vmatprep.subr.mxu0 0.0
  %368 = vmatpush1.msra.mxu0 0.0
  %369 = vmatprep.subr.mxu0 0.0
  %370 = vmatpush1.msra.mxu0 0.0
  %371 = vmatprep.subr.mxu0 0.0
  %372 = vmatpush1.msra.mxu0 0.0
  %373 = vmatprep.subr.mxu0 0.0
  %374 = vmatpush1.msra.mxu0 0.0
  %375 = vmatprep.subr.mxu0 0.0
  %376 = vmatpush1.msra.mxu0 0.0
  %377 = vmatprep.subr.mxu0 0.0
  %378 = vmatpush1.msra.mxu0 0.0
  %379 = vmatprep.mubr.f32.mxu0 0.0
  %380 = vmatmul.mubr.f32.gmra.mrb[0].mxu0 %v127
  %v381 = vpop.f32.mrb[0].mxu0
  %v382 = vadd.f32 0.0, %v381
  %v383 = vpop.f32.mrb[0].mxu0
  %384 = vmatprep.mubr.f32.mxu0 0.0
  %385 = vmatmul.mubr.f32.gmra.mrb[0].mxu0 %v130
  %v386 = vpop.f32.mrb[0].mxu0
  %v387 = vadd.f32 0.0, %v386
  %v388 = vpop.f32.mrb[0].mxu0
  %389 = vdwg.mxu0
  %390 = vst.msk [vmem:[%s3] sm:$0xff] %vm42, %v382
  %391 = vst.msk [vmem:[%s3 + $0x8] sm:$0xff] %vm42, %v387
  // Predicated region
  $region14: #{rgcn_forward.1} parent=0 // pred_check
    _
  $region15: #{rgcn_forward.1} parent=0 // pred_check_branch
    %393 = sbr.rel (0) target = $region17
  $region16: #{rgcn_forward.1} parent=0 // pred_region
    _
  $region17: #{rgcn_forward.1} parent=0 // pred_fallthru
    _
  // Predicated region
  $region18: #{rgcn_forward.1} parent=0 // pred_check
    _
  $region19: #{rgcn_forward.1} parent=0 // pred_check_branch
    %395 = sbr.rel (0) target = $region21
  $region20: #{rgcn_forward.1} parent=0 // pred_region
    _
  $region21: #{rgcn_forward.1} parent=0 // pred_fallthru
    _

</llo_original>
